<compile_context>
chip_gen: v6e
topology: v6e:2x2x1
jax: 0.10.0
libtpu: 0.0.40
codegen_flags: <defaults>
</compile_context>

<pallas_src>
import math

import jax
import jax.numpy as jnp
from jax.experimental import pallas as pl
from jax.experimental.pallas import tpu as pltpu


def _softplus_beta(x, beta):
    # PyTorch F.softplus(x, beta): (1/beta) * log1p(exp(beta*x)),
    # linear (returns x) when beta*x > 20 (default threshold).
    bx = beta * x
    return jnp.where(bx > 20.0, x, jnp.log1p(jnp.exp(jnp.minimum(bx, 20.0))) / beta)


def _magic_kernel_2_kernel(params_ref, d_ref, out_ref):
    # pre-computed scalar parameters in SMEM: [sigma, s, 1/(2*lengthscale^2)]
    sigma = params_ref[0]
    s = params_ref[1]
    inv2l2 = params_ref[2]

    d = d_ref[...].astype(jnp.float32)
    # k1 = (1 + exp(-d)) ** (-s)  ==  exp(-s * log1p(exp(-d)))   (exp/log1p on EUP)
    k1 = jnp.exp(-s * jnp.log1p(jnp.exp(-d)))
    # alpha = 1 is hard-coded in forward(): k2 = 1 / (1 + d^2 / (2 * lengthscale^2))
    # approx reciprocal keeps the divide purely on the EUP slot (no VALU refine).
    k2 = pl.reciprocal(1.0 + d * d * inv2l2, approx=True)
    out_ref[...] = (sigma * (k1 * k2)).astype(out_ref.dtype)


def _round_up(a, b):
    return ((a + b - 1) // b) * b


def _pick_width(n):
    # Widest lane-dense row width that (a) divides n exactly, so the reshape is a
    # zero-copy bitcast, and (b) leaves >= 8 rows so tiles fill whole (8,128) vregs.
    for w in (2048, 1024, 512, 256, 128):
        if n % w == 0 and n // w >= 8:
            return w
    for w in (2048, 1024, 512, 256, 128):
        if n % w == 0:
            return w
    return 128


_MAX_BLOCK_ELEMS = 512 * 1024   # ~2 MiB f32/tile -> ~8 MiB VMEM double-buffered (in+out)
_TARGET_STEPS = 8               # >= 4 pipelined grid steps; even -> v7x 2-TC split


def _pick_block_rows(rows, width):
    if rows <= 8:
        return rows, 1          # tiny input: single block (equal-full-dim is legal)
    max_block_rows = max(8, (_MAX_BLOCK_ELEMS // width) // 8 * 8)
    block_rows = _round_up(pl.cdiv(rows, _TARGET_STEPS), 8)
    block_rows = max(8, min(block_rows, max_block_rows))
    steps = pl.cdiv(rows, block_rows)
    # best-effort even step count so the "parallel" axis splits evenly across 2 TCs
    if steps > 1 and steps % 2 == 1:
        alt = max(8, min(_round_up(pl.cdiv(rows, steps + 1), 8), max_block_rows))
        if pl.cdiv(rows, alt) % 2 == 0:
            block_rows, steps = alt, pl.cdiv(rows, alt)
    return block_rows, steps


def magic_kernel_2_forward(time_diff, lengthscale_p, sigma_p, s_p, alpha_p=None):
    """num_types == 1 branch of magic_kernel_2.forward.

    time_diff: arbitrary-shaped float array; returns scores of the same shape.
    alpha_p accepted for parameter parity but unused (forward hard-codes alpha=1).
    """
    del alpha_p  # forward() overrides alpha with the literal 1
    orig_shape = time_diff.shape
    dtype = time_diff.dtype
    n = math.prod(orig_shape)

    # ---- scalar parameter math hoisted out of the kernel (runs once) ----
    lengthscale = _softplus_beta(lengthscale_p.astype(jnp.float32), 0.4)
    sigma = _softplus_beta(sigma_p.astype(jnp.float32), 1.0)
    s = _softplus_beta(s_p.astype(jnp.float32), 0.3)
    inv_two_l2 = 1.0 / (2.0 * lengthscale * lengthscale)
    params = jnp.concatenate(
        [sigma.reshape(1), s.reshape(1), inv_two_l2.reshape(1)]
    ).astype(jnp.float32)

    # ---- flatten to a lane-dense 2-D slab with NO host-side padding/slicing ----
    flat = time_diff.reshape(-1)
    if n > 0 and n % 128 == 0:
        width = _pick_width(n)
        padded = False
    else:
        # TODO(synk): rare ragged path (n not a multiple of 128) still pays one pad
        # copy + one slice copy; every 128-aligned size takes the zero-copy path.
        width = 128
        n_pad = _round_up(max(n, 1), 128)
        flat = jnp.pad(flat, (0, n_pad - n))
        padded = True

    rows = flat.shape[0] // width
    x2d = flat.reshape(rows, width)                     # contiguous reshape: bitcast
    block_rows, grid_steps = _pick_block_rows(rows, width)

    bytes_per_el = jnp.dtype(dtype).itemsize
    out2d = pl.pallas_call(
        _magic_kernel_2_kernel,
        out_shape=jax.ShapeDtypeStruct((rows, width), dtype),
        grid=(grid_steps,),
        in_specs=[
            pl.BlockSpec(memory_space=pltpu.SMEM),                 # [sigma, s, 1/(2l^2)]
            pl.BlockSpec((block_rows, width), lambda i: (i, 0)),   # d tile
        ],
        out_specs=pl.BlockSpec((block_rows, width), lambda i: (i, 0)),
        compiler_params=pltpu.CompilerParams(
            dimension_semantics=("parallel",),
            vmem_limit_bytes=32 * 1024 * 1024,
        ),
        cost_estimate=pl.CostEstimate(
            flops=8 * n,
            transcendentals=4 * n,                      # exp, log1p, exp, reciprocal
            bytes_accessed=2 * bytes_per_el * n,
        ),
    )(params, x2d)

    out = out2d.reshape(-1)
    if padded:
        out = out[:n]
    return out.reshape(orig_shape)


def _reference(time_diff, lengthscale_p, sigma_p, s_p):
    # literal transcription of the PyTorch forward (num_types == 1 branch)
    lengthscale = _softplus_beta(lengthscale_p, 0.4)
    sigma = _softplus_beta(sigma_p, 1.0)
    s = _softplus_beta(s_p, 0.3)
    d = time_diff
    k1 = (1.0 + jnp.exp(-d)) ** (-s)
    alpha = 1.0
    k2 = (1.0 + d ** 2 / (2.0 * alpha * lengthscale ** 2)) ** (-alpha)
    return sigma * k1 * k2


if __name__ == "__main__":
    key = jax.random.PRNGKey(0)
    k_d, k_l, k_sig, k_a, k_s = jax.random.split(key, 5)

    # small shapes: batch=4 sequences of length 16 -> pairwise time differences
    batch, seq = 4, 16
    time_diff = jnp.abs(jax.random.normal(k_d, (batch, seq, seq), jnp.float32))

    # module parameters (num_types == 1 branch): four scalar Parameters
    lengthscale_p = jax.random.normal(k_l, (1,), jnp.float32)
    sigma_p = jax.random.normal(k_sig, (1,), jnp.float32)
    alpha_p = jax.random.normal(k_a, (1,), jnp.float32)   # unused in forward (alpha=1)
    s_p = jax.random.normal(k_s, (1,), jnp.float32)

    fwd = jax.jit(magic_kernel_2_forward)
    scores = fwd(time_diff, lengthscale_p, sigma_p, s_p, alpha_p)
    scores = jax.block_until_ready(scores)

    ref = _reference(time_diff, lengthscale_p, sigma_p, s_p)
    assert scores.shape == time_diff.shape
    # tolerance loosened slightly vs 1e-5 because k2 uses the EUP approx reciprocal
    assert jnp.allclose(scores, ref, atol=2e-3, rtol=2e-3), float(
        jnp.max(jnp.abs(scores - ref)))

    print("KERNEL_OK")
</pallas_src>

<mosaic_0001>
module attributes {stable_mosaic.version = 11 : i64} {
  func.func @_magic_kernel_2_kernel(%arg0: i32, %arg1: memref<3xf32, #tpu.memory_space<smem>>, %arg2: memref<8x128xf32, #tpu.memory_space<vmem>>, %arg3: memref<8x128xf32, #tpu.memory_space<vmem>>) attributes {dimension_semantics = [#tpu.dimension_semantics<parallel>], iteration_bounds = array<i64: 1>, scalar_prefetch = 0 : i64, scratch_operands = 0 : i64, tpu.core_type = #tpu.core_type<tc>, window_params = [{transform_indices = @transform_0, window_bounds = array<i64: 3>}, {transform_indices = @transform_1, window_bounds = array<i64: 8, 128>}, {transform_indices = @transform_2, window_bounds = array<i64: 8, 128>}]} {
    %c0 = arith.constant 0 : index
    %0 = memref.load %arg1[%c0] : memref<3xf32, #tpu.memory_space<smem>>
    %c1 = arith.constant 1 : index
    %1 = memref.load %arg1[%c1] : memref<3xf32, #tpu.memory_space<smem>>
    %c2 = arith.constant 2 : index
    %2 = memref.load %arg1[%c2] : memref<3xf32, #tpu.memory_space<smem>>
    %c0_0 = arith.constant 0 : index
    %c0_1 = arith.constant 0 : index
    %3 = vector.load %arg2[%c0_0, %c0_1] : memref<8x128xf32, #tpu.memory_space<vmem>>, vector<8x128xf32>
    %cst = arith.constant 0.000000e+00 : f32
    %4 = arith.subf %cst, %1 : f32
    %cst_2 = arith.constant 0.000000e+00 : f32
    %5 = vector.broadcast %cst_2 : f32 to vector<8x128xf32>
    %6 = arith.subf %5, %3 : vector<8x128xf32>
    %7 = math.exp %6 : vector<8x128xf32>
    %8 = math.log1p %7 : vector<8x128xf32>
    %9 = vector.broadcast %4 : f32 to vector<8x128xf32>
    %10 = arith.mulf %9, %8 : vector<8x128xf32>
    %11 = math.exp %10 : vector<8x128xf32>
    %12 = arith.mulf %3, %3 : vector<8x128xf32>
    %13 = vector.broadcast %2 : f32 to vector<8x128xf32>
    %14 = arith.mulf %12, %13 : vector<8x128xf32>
    %cst_3 = arith.constant 1.000000e+00 : f32
    %15 = vector.broadcast %cst_3 : f32 to vector<8x128xf32>
    %16 = arith.addf %15, %14 : vector<8x128xf32>
    %17 = tpu.reciprocal %16 {approx = true} : vector<8x128xf32> -> vector<8x128xf32>
    %18 = arith.mulf %11, %17 : vector<8x128xf32>
    %19 = vector.broadcast %0 : f32 to vector<8x128xf32>
    %20 = arith.mulf %19, %18 : vector<8x128xf32>
    %c0_4 = arith.constant 0 : index
    %c0_5 = arith.constant 0 : index
    %21 = vector.load %arg3[%c0_4, %c0_5] : memref<8x128xf32, #tpu.memory_space<vmem>>, vector<8x128xf32>
    tpu.vector_store %arg3[%c0_4, %c0_5], %20 {strides = array<i32>} : memref<8x128xf32, #tpu.memory_space<vmem>>, vector<8x128xf32>,
    return
  }
  func.func @transform_0(%arg0: i32) -> i32 {
    %c0_i32 = arith.constant 0 : i32
    %c0_i32_0 = arith.constant 0 : i32
    return %c0_i32 : i32
  }
  func.func @transform_1(%arg0: i32) -> (i32, i32) {
    %c0_i32 = arith.constant 0 : i32
    %c0_i32_0 = arith.constant 0 : i32
    return %arg0, %c0_i32 : i32, i32
  }
  func.func @transform_2(%arg0: i32) -> (i32, i32) {
    %c0_i32 = arith.constant 0 : i32
    %c0_i32_0 = arith.constant 0 : i32
    return %arg0, %c0_i32 : i32, i32
  }
}

</mosaic_0001>

<llo_original>
// kernel: magic_kernel_2_forward.1
$region0: #{magic_kernel_2_forward.1}
  #allocation0 [shape = 'u32[]', space=smem, size = 0x4, offset = 0x4, fixed_abs, tag = 'smem constant byte address 0x4 - core index']
  #allocation1 [shape = 'u32[144,128]{1,0:T(1,128)}', space=vmem, size = 0x12000, scoped, tag = 'internal scratch']
  %s0 = inlined_call_operand.vmem [shape: f32[3], index: 0, kind: input, shape index: {}]
  %s1 = inlined_call_operand.vmem [shape: f32[8,128], index: 1, kind: input, shape index: {}]
  %s2 = inlined_call_operand.vmem [shape: f32[8,128], index: 2, kind: output, shape index: {}]
  %s3 = sld [smem:[#allocation0]]
  $region22: #{magic_kernel_2_forward.1} parent=0
    _
  %s5 = ssub.s32 1, %s3
  %s6 = scalar_select 0, %s5, %s3
  $region1: #{magic_kernel_2_forward.1} parent=0
    #allocation2 [shape = 'u8[512]{0}', space=smem, size = 0x200, scoped, tag = 'input window, operand 0, single buffered']
    #allocation3 [shape = 's32[1]{0}', space=sflag, size = 0x4, scoped, tag = 'scoped memory for magic_kernel_2_forward.1']
    %7 = vsyncpa [#allocation3], 0
    // Predicated region
    $region2: #{magic_kernel_2_forward.1} parent=1 // pred_check
      _
    $region3: #{magic_kernel_2_forward.1} parent=1 // pred_check_branch
      %9 = sbr.rel (0) target = $region5
    $region4: #{magic_kernel_2_forward.1} parent=1 // pred_region
      %s11 = ssub.s32 16, 16
      %12 = vsyncadd [#allocation3], %s11
      %s14 = sshll.u32 %s0, 4
      %s15 = int_to_ptr.vmem [resolvable:$true] %s14
      %17 = dma.vmem_to_smem %s15, 16, [#allocation2], [#allocation3]
    $region5: #{magic_kernel_2_forward.1} parent=1 // pred_fallthru
      _
    // Predicated region
    $region6: #{magic_kernel_2_forward.1} parent=1 // pred_check
      _
    $region7: #{magic_kernel_2_forward.1} parent=1 // pred_check_branch
      %19 = sbr.rel (0) target = $region9
    $region8: #{magic_kernel_2_forward.1} parent=1 // pred_region
      _
    $region9: #{magic_kernel_2_forward.1} parent=1 // pred_fallthru
      _
    // Predicated region
    $region10: #{magic_kernel_2_forward.1} parent=1 // pred_check
      _
    $region11: #{magic_kernel_2_forward.1} parent=1 // pred_check_branch
      %21 = sbr.rel (0) target = $region13
    $region12: #{magic_kernel_2_forward.1} parent=1 // pred_region
      %22 = dma.done [#allocation3], 16
    $region13: #{magic_kernel_2_forward.1} parent=1 // pred_fallthru
      _
    %23 = sfence
    %s24 = sld [smem:[#allocation2]]
    %s25 = sld [smem:[#allocation2 + $0x1]]
    %s26 = sld [smem:[#allocation2 + $0x2]]
    %v27 = vld [vmem:[%s1] sm:$0xff]
    %s28 = ssub.f32 0.0, %s25
    %v29 = vsub.f32 0.0, %v27
    %v30 = vmul.f32 %v29, 1.442695
    %v31 = vpow.pop %v30
    %v32 = vadd.f32 %v31, 1.0
    %v33 = vlog2.pop %v32
    %v34 = vmul.f32 %v33, 0.6931472
    %v35 = vmul.f32 -0.5, %v31
    %v36 = vadd.f32 %v35, 1.0
    %v37 = vmul.f32 %v36, %v31
    %v38 = vand.u32 2147483647, %v31
    %vm39 = vcmp.lt.f32.partialorder %v38, 0.0004427343
    %v40 = vsel %vm39, %v37, %v34
    %v41 = vstv %s28
    %v42 = vmul.f32 %v41, %v40
    %v43 = vmul.f32 %v42, 1.442695
    %v44 = vpow.pop %v43
    %v45 = vmul.f32 %v27, %v27
    %v46 = vstv %s26
    %v47 = vmul.f32 %v45, %v46
    %v48 = vadd.f32 %v47, 1.0
    %v49 = vrcp.pop %v48
    %v50 = vmul.f32 %v44, %v49
    %v51 = vstv %s24
    %v52 = vmul.f32 %v51, %v50
    %53 = vst [vmem:[%s2] sm:$0xff] %v52
    // Predicated region
    $region14: #{magic_kernel_2_forward.1} parent=1 // pred_check
      _
    $region15: #{magic_kernel_2_forward.1} parent=1 // pred_check_branch
      %55 = sbr.rel (0) target = $region17
    $region16: #{magic_kernel_2_forward.1} parent=1 // pred_region
      _
    $region17: #{magic_kernel_2_forward.1} parent=1 // pred_fallthru
      _
    // Predicated region
    $region18: #{magic_kernel_2_forward.1} parent=1 // pred_check
      _
    $region19: #{magic_kernel_2_forward.1} parent=1 // pred_check_branch
      %57 = sbr.rel (0) target = $region21
    $region20: #{magic_kernel_2_forward.1} parent=1 // pred_region
      _
    $region21: #{magic_kernel_2_forward.1} parent=1 // pred_fallthru
      _
    %58 = vsyncpa [#allocation3], 1

</llo_original>
